<compile_context>
chip_gen: v5e
topology: v5e:2x2
jax: 0.10.0
libtpu: 0.0.40
codegen_flags: <defaults>
</compile_context>

<pallas_src>
import jax
import jax.numpy as jnp
from jax.experimental import pallas as pl
from jax.experimental.pallas import tpu as pltpu


def skipgram_loss_kernel(tc_idx_ref, neg_idx_ref, emb_ref, o_ref):
    # tc_idx_ref : (2B, 1) int32 VMEM  -- [target_idx ; context_idx]
    # neg_idx_ref: (K, 1)  int32 VMEM  -- shared negative-sample indices
    # emb_ref    : (V, D)  f32   VMEM  -- full embedding table
    # o_ref      : (1, 1)  f32   SMEM  -- scalar loss
    V, D = emb_ref.shape
    two_b = tc_idx_ref.shape[0]
    B = two_b // 2
    K = neg_idx_ref.shape[0]

    tab = emb_ref[...]                                           # (V, D)

    # ---- one-hot MXU gather (no serialized scalar-load chain) -------------
    tc_idx = tc_idx_ref[...]                                     # (2B, 1)
    oh_tc = (jax.lax.broadcasted_iota(jnp.int32, (two_b, V), 1)
             == tc_idx).astype(tab.dtype)                        # (2B, V)
    tc_rows = jnp.dot(oh_tc, tab,
                      preferred_element_type=jnp.float32)        # (2B, D)
    t = tc_rows[:B]                                              # (B, D)
    c = tc_rows[B:]                                              # (B, D)

    ng_idx = neg_idx_ref[...]                                    # (K, 1)
    oh_n = (jax.lax.broadcasted_iota(jnp.int32, (K, V), 1)
            == ng_idx).astype(tab.dtype)                         # (K, V)
    negs = jnp.dot(oh_n, tab,
                   preferred_element_type=jnp.float32)           # (K, D)

    # ---- scores ------------------------------------------------------------
    pos_score = jnp.sum(t * c, axis=1, keepdims=True)            # (B, 1)
    neg_scores = jnp.einsum('bd,kd->bk', t, negs,
                            preferred_element_type=jnp.float32)  # (B, K)

    # ---- one fused log_sigmoid over all K+1 score columns ------------------
    scores = jnp.concatenate([pos_score, -neg_scores], axis=1)   # (B, K+1)
    loss_terms = jax.nn.log_sigmoid(scores)                      # (B, K+1)

    # loss = -mean_b( pos_b + sum_k neg_bk ) ; 1/B is a compile-time constant.
    o_ref[0, 0] = -(jnp.sum(loss_terms) * (1.0 / B))


def skipgram_forward(embeddings, target_idx, context_idx, neg_idx):
    """Single fused Pallas call: one-hot gathers + loss, scalar via SMEM."""
    B = target_idx.shape[0]
    K = neg_idx.shape[0]

    tc_idx = jnp.concatenate([target_idx, context_idx]).reshape(2 * B, 1)
    ng_idx = neg_idx.reshape(K, 1).astype(jnp.int32)

    out = pl.pallas_call(
        skipgram_loss_kernel,
        out_shape=jax.ShapeDtypeStruct((1, 1), jnp.float32),
        in_specs=[
            pl.BlockSpec(memory_space=pltpu.MemorySpace.VMEM),   # tc indices
            pl.BlockSpec(memory_space=pltpu.MemorySpace.VMEM),   # neg indices
            pl.BlockSpec(memory_space=pltpu.MemorySpace.VMEM),   # table
        ],
        out_specs=pl.BlockSpec(memory_space=pltpu.MemorySpace.SMEM),
    )(tc_idx.astype(jnp.int32), ng_idx, embeddings)
    return out[0, 0]


def reference_forward(embeddings, target_idx, context_idx, neg_idx):
    """Pure-JAX reference mirroring the PyTorch module."""
    t = embeddings[target_idx]
    c = embeddings[context_idx]
    pos_loss = jax.nn.log_sigmoid(jnp.sum(t * c, axis=1))
    neg_loss = jnp.zeros_like(pos_loss)
    for k in range(neg_idx.shape[0]):
        nt = embeddings[neg_idx[k]][None, :]                     # (1, D)
        neg_loss = neg_loss + jax.nn.log_sigmoid(-jnp.sum(t * nt, axis=1))
    return -jnp.mean(pos_loss + neg_loss)


if __name__ == "__main__":
    vocab_size = 50
    embedding_dim = 32
    negative_samples = 3
    batch = 8

    key = jax.random.PRNGKey(0)
    k_emb, k_tgt, k_ctx, k_neg = jax.random.split(key, 4)

    # nn.Embedding default init: N(0, 1)
    embeddings = jax.random.normal(k_emb, (vocab_size, embedding_dim),
                                   dtype=jnp.float32)
    target_idx = jax.random.randint(k_tgt, (batch,), 0, vocab_size,
                                    dtype=jnp.int32)
    context_idx = jax.random.randint(k_ctx, (batch,), 0, vocab_size,
                                     dtype=jnp.int32)
    # TODO(synk): python random.randint negative sampling replaced by
    # deterministic jax.random sampling (same shared-across-batch semantics).
    neg_idx = jax.random.randint(k_neg, (negative_samples,), 0, vocab_size,
                                 dtype=jnp.int32)

    loss = skipgram_forward(embeddings, target_idx, context_idx, neg_idx)
    loss = jax.block_until_ready(loss)

    ref = reference_forward(embeddings, target_idx, context_idx, neg_idx)
    assert jnp.allclose(loss, ref, rtol=1e-5, atol=1e-5), (loss, ref)

    print("KERNEL_OK")
</pallas_src>

<mosaic_0001>
module attributes {stable_mosaic.version = 11 : i64} {
  func.func @skipgram_loss_kernel(%arg0: memref<16x1xi32, #tpu.memory_space<vmem>>, %arg1: memref<3x1xi32, #tpu.memory_space<vmem>>, %arg2: memref<50x32xf32, #tpu.memory_space<vmem>>, %arg3: memref<1x1xf32, #tpu.memory_space<smem>>) attributes {dimension_semantics = [], scalar_prefetch = 0 : i64, scratch_operands = 0 : i64, tpu.core_type = #tpu.core_type<tc>} {
    %c0 = arith.constant 0 : index
    %c0_0 = arith.constant 0 : index
    %0 = vector.load %arg2[%c0, %c0_0] : memref<50x32xf32, #tpu.memory_space<vmem>>, vector<50x32xf32>
    %c0_1 = arith.constant 0 : index
    %c0_2 = arith.constant 0 : index
    %1 = vector.load %arg0[%c0_1, %c0_2] : memref<16x1xi32, #tpu.memory_space<vmem>>, vector<16x1xi32>
    %2 = tpu.iota {dimensions = array<i32: 1>} : vector<16x50xi32>
    %3 = vector.broadcast %1 : vector<16x1xi32> to vector<16x50xi32>
    %4 = arith.cmpi eq, %2, %3 : vector<16x50xi32>
    %5 = arith.extui %4 : vector<16x50xi1> to vector<16x50xi32>
    %6 = arith.sitofp %5 : vector<16x50xi32> to vector<16x50xf32>
    %cst = arith.constant dense<0.000000e+00> : vector<16x32xf32>
    %7 = tpu.matmul %6, %0, %cst {dimension_numbers = #tpu.dot_dimension_numbers<[1], [0], [0], [1], [0, 0, 1, 1], [], []>} : vector<16x50xf32>, vector<50x32xf32>, vector<16x32xf32> -> vector<16x32xf32>
    %8 = vector.extract_strided_slice %7 {offsets = [0, 0], sizes = [8, 32], strides = [1, 1]} : vector<16x32xf32> to vector<8x32xf32>
    %9 = vector.extract_strided_slice %7 {offsets = [8, 0], sizes = [8, 32], strides = [1, 1]} : vector<16x32xf32> to vector<8x32xf32>
    %c0_3 = arith.constant 0 : index
    %c0_4 = arith.constant 0 : index
    %10 = vector.load %arg1[%c0_3, %c0_4] : memref<3x1xi32, #tpu.memory_space<vmem>>, vector<3x1xi32>
    %11 = tpu.iota {dimensions = array<i32: 1>} : vector<3x50xi32>
    %12 = vector.broadcast %10 : vector<3x1xi32> to vector<3x50xi32>
    %13 = arith.cmpi eq, %11, %12 : vector<3x50xi32>
    %14 = arith.extui %13 : vector<3x50xi1> to vector<3x50xi32>
    %15 = arith.sitofp %14 : vector<3x50xi32> to vector<3x50xf32>
    %cst_5 = arith.constant dense<0.000000e+00> : vector<3x32xf32>
    %16 = tpu.matmul %15, %0, %cst_5 {dimension_numbers = #tpu.dot_dimension_numbers<[1], [0], [0], [1], [0, 0, 1, 1], [], []>} : vector<3x50xf32>, vector<50x32xf32>, vector<3x32xf32> -> vector<3x32xf32>
    %17 = arith.mulf %8, %9 : vector<8x32xf32>
    %cst_6 = arith.constant dense<0.000000e+00> : vector<8xf32>
    %18 = vector.multi_reduction <add>, %17, %cst_6 [1] : vector<8x32xf32> to vector<8xf32>
    %19 = vector.shape_cast %18 : vector<8xf32> to vector<8x1xf32>
    "tpu.trace_start"() <{level = 10 : i32, message = "bd,kd->bk"}> : () -> ()
    %cst_7 = arith.constant dense<0.000000e+00> : vector<8x3xf32>
    %20 = tpu.matmul %8, %16, %cst_7 {dimension_numbers = #tpu.dot_dimension_numbers<[1], [1], [0], [0], [0, 0, 1, 0], [], []>} : vector<8x32xf32>, vector<3x32xf32>, vector<8x3xf32> -> vector<8x3xf32>
    "tpu.trace_stop"() : () -> ()
    %cst_8 = arith.constant 0.000000e+00 : f32
    %21 = vector.broadcast %cst_8 : f32 to vector<8x3xf32>
    %22 = arith.subf %21, %20 : vector<8x3xf32>
    %23 = tpu.concatenate %19, %22 in 1 : vector<8x1xf32>, vector<8x3xf32> -> vector<8x4xf32>
    %cst_9 = arith.constant 0.000000e+00 : f32
    %24 = vector.broadcast %cst_9 : f32 to vector<8x4xf32>
    %25 = arith.subf %24, %23 : vector<8x4xf32>
    %cst_10 = arith.constant 0.000000e+00 : f32
    %26 = vector.broadcast %cst_10 : f32 to vector<8x4xf32>
    %27 = arith.maximumf %25, %26 : vector<8x4xf32>
    %28 = vector.broadcast %cst_10 : f32 to vector<8x4xf32>
    %29 = arith.subf %25, %28 : vector<8x4xf32>
    %30 = arith.cmpf one, %29, %29 : vector<8x4xf32>
    %31 = vector.broadcast %cst_10 : f32 to vector<8x4xf32>
    %32 = arith.addf %25, %31 : vector<8x4xf32>
    %33 = math.absf %29 : vector<8x4xf32>
    %cst_11 = arith.constant 0.000000e+00 : f32
    %34 = vector.broadcast %cst_11 : f32 to vector<8x4xf32>
    %35 = arith.subf %34, %33 : vector<8x4xf32>
    %36 = math.exp %35 : vector<8x4xf32>
    %37 = math.log1p %36 : vector<8x4xf32>
    %38 = arith.addf %27, %37 : vector<8x4xf32>
    %39 = arith.select %30, %32, %38 : vector<8x4xi1>, vector<8x4xf32>
    %cst_12 = arith.constant 0.000000e+00 : f32
    %40 = vector.broadcast %cst_12 : f32 to vector<8x4xf32>
    %41 = arith.subf %40, %39 : vector<8x4xf32>
    %42 = vector.shape_cast %41 : vector<8x4xf32> to vector<1x8x4xf32>
    %cst_13 = arith.constant dense<0.000000e+00> : vector<1xf32>
    %43 = vector.multi_reduction <add>, %42, %cst_13 [1, 2] : vector<1x8x4xf32> to vector<1xf32>
    %44 = vector.shape_cast %43 : vector<1xf32> to vector<1x1x1xf32>
    %45 = vector.extract %44[0, 0, 0] : f32 from vector<1x1x1xf32>
    %cst_14 = arith.constant 1.250000e-01 : f32
    %46 = arith.mulf %45, %cst_14 : f32
    %cst_15 = arith.constant 0.000000e+00 : f32
    %47 = arith.subf %cst_15, %46 : f32
    %c0_16 = arith.constant 0 : index
    %c0_17 = arith.constant 0 : index
    %48 = memref.load %arg3[%c0_16, %c0_17] : memref<1x1xf32, #tpu.memory_space<smem>>
    memref.store %47, %arg3[%c0_16, %c0_17] : memref<1x1xf32, #tpu.memory_space<smem>>
    return
  }
}

</mosaic_0001>

<llo_original>
// kernel: tpu_custom_call.1
$region0: #{tpu_custom_call.1}
  #allocation0 [shape = 'u32[]', space=smem, size = 0x4, offset = 0x4, fixed_abs, tag = 'smem constant byte address 0x4 - core index']
  #allocation1 [shape = 'u32[72,128]{1,0:T(1,128)}', space=vmem, size = 0x9000, scoped, tag = 'internal scratch']
  %s0 = inlined_call_operand.vmem [shape: s32[16,1], index: 0, kind: input, shape index: {}]
  %s1 = inlined_call_operand.vmem [shape: s32[3,1], index: 1, kind: input, shape index: {}]
  %s2 = inlined_call_operand.vmem [shape: f32[50,32], index: 2, kind: input, shape index: {}]
  %s3 = inlined_call_operand.hbm [shape: f32[1,1], index: 3, kind: output, shape index: {}]
  %s4 = sld [smem:[#allocation0]]
  $region22: #{tpu_custom_call.1} parent=0
    _
  %s6 = ssub.s32 1, %s4
  %s7 = scalar_select 0, %s6, %s4
  $region1: #{tpu_custom_call.1} parent=0
    #allocation2 [shape = 'u8[512]{0}', space=smem, size = 0x200, scoped, tag = 'output window, operand 0, single buffered']
    #allocation3 [shape = 's32[1]{0}', space=sflag, size = 0x4, scoped, tag = 'scoped memory for tpu_custom_call.1']
    %8 = vsyncpa [#allocation3], 0
    // Predicated region
    $region2: #{tpu_custom_call.1} parent=1 // pred_check
      _
    $region3: #{tpu_custom_call.1} parent=1 // pred_check_branch
      %10 = sbr.rel (0) target = $region5
    $region4: #{tpu_custom_call.1} parent=1 // pred_region
      _
    $region5: #{tpu_custom_call.1} parent=1 // pred_fallthru
      _
    // Predicated region
    $region6: #{tpu_custom_call.1} parent=1 // pred_check
      _
    $region7: #{tpu_custom_call.1} parent=1 // pred_check_branch
      %12 = sbr.rel (0) target = $region9
    $region8: #{tpu_custom_call.1} parent=1 // pred_region
      _
    $region9: #{tpu_custom_call.1} parent=1 // pred_fallthru
      _
    // Predicated region
    $region10: #{tpu_custom_call.1} parent=1 // pred_check
      _
    $region11: #{tpu_custom_call.1} parent=1 // pred_check_branch
      %14 = sbr.rel (0) target = $region13
    $region12: #{tpu_custom_call.1} parent=1 // pred_region
      _
    $region13: #{tpu_custom_call.1} parent=1 // pred_fallthru
      _
    %v15 = vld [vmem:[%s2] sm:$0xff]
    %v16 = vld [vmem:[%s2 + $0x8] sm:$0xff]
    %v17 = vld [vmem:[%s2 + $0x10] sm:$0xff]
    %v18 = vld [vmem:[%s2 + $0x18] sm:$0xff]
    %v19 = vld [vmem:[%s2 + $0x20] sm:$0xff]
    %v20 = vld [vmem:[%s2 + $0x28] sm:$0xff]
    %v21 = vld [vmem:[%s2 + $0x30] sm:$0x3]
    %v22 = vld [vmem:[%s0] sm:$0xff]
    %v23 = vld [vmem:[%s0 + $0x8] sm:$0xff]
    %v24 = vlaneseq
    %v25 = vand.u32 %v24, 127
    %26 = vset.pattern.permute.xlu0 0
    %27 = vperm.xlu0 %26, %v22
    %v28 = vpop.permute.xlu0 %27
    %29 = vset.pattern.permute.xlu0 0
    %30 = vperm.xlu0 %29, %v23
    %v31 = vpop.permute.xlu0 %30
    %vm32 = vcmp.eq.s32.totalorder %v25, %v28
    %vm33 = vcmp.eq.s32.totalorder %v25, %v31
    %v34 = vsel %vm32, 1, 0
    %v35 = vsel %vm33, 1, 0
    %v36 = vcvt.s32.f32 %v34
    %v37 = vcvt.s32.f32 %v35
    %vm38 = vcmask 408576
    %v40 = vsel %vm38, %v36, 0
    %v43 = vsel %vm38, %v37, 0
    %vm45 = vcmask 1041408
    %v47 = vsel %vm45, %v21, 0
    %49 = vmatpush.msra.mxu0 0.0
    %50 = vmatpush.msra.mxu0 0.0
    %51 = vmatpush.msra.mxu0 0.0
    %52 = vmatpush.msra.mxu0 0.0
    %53 = vmatpush.msra.mxu0 0.0
    %54 = vmatpush.msra.mxu0 0.0
    %55 = vmatpush.msra.mxu0 0.0
    %56 = vmatpush.msra.mxu0 0.0
    %57 = vmatpush.msra.mxu0 0.0
    %58 = vmatpush.msra.mxu0 %v47
    %59 = vmatpush.msra.mxu0 %v20
    %60 = vmatpush.msra.mxu0 %v19
    %61 = vmatpush.msra.mxu0 %v18
    %62 = vmatpush.msra.mxu0 %v17
    %63 = vmatpush.msra.mxu0 %v16
    %64 = vmatpush.msra.mxu0 %v15
    %65 = vmatmul.f32.gmra.mxu0 %v40
    %v66 = vpop.f32.mrf.mxu0
    %v67 = vadd.f32 0.0, %v66
    %68 = vmatmul.f32.gmra.mxu0 %v43
    %v69 = vpop.f32.mrf.mxu0
    %v70 = vadd.f32 0.0, %v69
    %71 = vdwg.mxu0
    %v72 = vld [vmem:[%s1] sm:$0x7]
    %73 = vset.pattern.permute.xlu0 0
    %74 = vperm.xlu0 %73, %v72
    %v75 = vpop.permute.xlu0 %74
    %vm76 = vcmp.eq.s32.totalorder %v25, %v75
    %v77 = vsel %vm76, 1, 0
    %v78 = vcvt.s32.f32 %v77
    %v80 = vsel %vm38, %v78, 0
    %82 = vmatpush.msra.mxu0 0.0
    %83 = vmatpush.msra.mxu0 0.0
    %84 = vmatpush.msra.mxu0 0.0
    %85 = vmatpush.msra.mxu0 0.0
    %86 = vmatpush.msra.mxu0 0.0
    %87 = vmatpush.msra.mxu0 0.0
    %88 = vmatpush.msra.mxu0 0.0
    %89 = vmatpush.msra.mxu0 0.0
    %90 = vmatpush.msra.mxu0 0.0
    %91 = vmatpush.msra.mxu0 %v47
    %92 = vmatpush.msra.mxu0 %v20
    %93 = vmatpush.msra.mxu0 %v19
    %94 = vmatpush.msra.mxu0 %v18
    %95 = vmatpush.msra.mxu0 %v17
    %96 = vmatpush.msra.mxu0 %v16
    %97 = vmatpush.msra.mxu0 %v15
    %98 = vmatmul.f32.gmra.mxu0 %v80
    %v99 = vpop.f32.mrf.mxu0
    %v100 = vadd.f32 0.0, %v99
    %101 = vdwg.mxu0
    %v102 = vmul.f32 %v67, %v70
    %vm103 = vcmask 261120
    %v104 = vsel %vm103, %v102, 0.0
    %105 = vadd.xlane.f32.xlu0 %v104
    %v106 = vpop.xlane.xlu0 %105
    %v108 = vsel %vm103, %v67, 0
    %v111 = vsel %vm103, %v100, 0
    %113 = vmatpush.xpose.msra.mxu0 0.0
    %114 = vmatpush.xpose.msra.mxu0 0.0
    %115 = vmatpush.xpose.msra.mxu0 0.0
    %116 = vmatpush.xpose.msra.mxu0 0.0
    %117 = vmatpush.xpose.msra.mxu0 0.0
    %118 = vmatpush.xpose.msra.mxu0 0.0
    %119 = vmatpush.xpose.msra.mxu0 0.0
    %120 = vmatpush.xpose.msra.mxu0 0.0
    %121 = vmatpush.xpose.msra.mxu0 0.0
    %122 = vmatpush.xpose.msra.mxu0 0.0
    %123 = vmatpush.xpose.msra.mxu0 0.0
    %124 = vmatpush.xpose.msra.mxu0 0.0
    %125 = vmatpush.xpose.msra.mxu0 0.0
    %126 = vmatpush.xpose.msra.mxu0 0.0
    %127 = vmatpush.xpose.msra.mxu0 0.0
    %128 = vmatpush.xpose.msra.mxu0 %v111
    %129 = vmatmul.f32.gmra.mxu0 %v108
    %v130 = vpop.f32.mrf.mxu0
    %v131 = vadd.f32 0.0, %v130
    %132 = vdwg.mxu0
    %v133 = vsub.f32 0.0, %v131
    %135 = vrot.lane.b32.xlu0 %v133, 1
    %v136 = vpop.permute.xlu0 %135
    %vm138 = vcmask 7168
    %v139 = vsel %vm138, %v106, %v136
    %v140 = vsub.f32 0.0, %v139
    %v141 = vmax.f32 %v140, 0.0
    %vm142 = vcmp.ne.f32.partialorder %v140, %v140
    %v143 = vadd.f32 %v140, 0.0
    %v144 = vand.u32 2147483647, %v140
    %v145 = vsub.f32 0.0, %v144
    %v146 = vmul.f32 %v145, 1.442695
    %v147 = vpow.pop %v146
    %v148 = vadd.f32 %v147, 1.0
    %v149 = vlog2.pop %v148
    %v150 = vmul.f32 %v149, 0.6931472
    %v151 = vmul.f32 -0.5, %v147
    %v152 = vadd.f32 %v151, 1.0
    %v153 = vmul.f32 %v152, %v147
    %v154 = vand.u32 2147483647, %v147
    %vm155 = vcmp.lt.f32.partialorder %v154, 0.0004427343
    %v156 = vsel %vm155, %v153, %v150
    %v157 = vadd.f32 %v141, %v156
    %v158 = vsel %vm142, %v143, %v157
    %v159 = vsub.f32 0.0, %v158
    %vm160 = vcmask 31744
    %v161 = vsel %vm160, %v159, 0.0
    %162 = vadd.xlane.f32.xlu0 %v161
    %v163 = vpop.xlane.xlu0 %162
    %v164 = vrot.slane %v163, 4
    %v165 = vadd.f32 %v163, %v164
    %v166 = vrot.slane %v165, 2
    %v167 = vadd.f32 %v165, %v166
    %v168 = vrot.slane %v167, 1
    %v169 = vadd.f32 %v167, %v168
    %s170 = vtos %v169
    %s171 = smul.f32 %s170, 0.125
    %s172 = ssub.f32 0.0, %s171
    %s173 = scalar_lea.smem [#allocation2], 0
    %174 = sst [smem:[%s173]] %s172
    // Predicated region
    $region14: #{tpu_custom_call.1} parent=1 // pred_check
      _
    $region15: #{tpu_custom_call.1} parent=1 // pred_check_branch
      %176 = sbr.rel (0) target = $region17
    $region16: #{tpu_custom_call.1} parent=1 // pred_region
      %178 = vsyncadd [#allocation3], 0
      %s180 = sshll.u32 %s3, 4
      %s181 = int_to_ptr.hbm [resolvable:$true] %s180
      %183 = dma.smem_to_hbm [#allocation2], 16, %s181, [#allocation3]
    $region17: #{tpu_custom_call.1} parent=1 // pred_fallthru
      _
    // Predicated region
    $region18: #{tpu_custom_call.1} parent=1 // pred_check
      _
    $region19: #{tpu_custom_call.1} parent=1 // pred_check_branch
      %185 = sbr.rel (0) target = $region21
    $region20: #{tpu_custom_call.1} parent=1 // pred_region
      %187 = dma.done [#allocation3], 16
    $region21: #{tpu_custom_call.1} parent=1 // pred_fallthru
      _
    %188 = sfence
    %189 = vsyncpa [#allocation3], 1

</llo_original>
